<compile_context>
chip_gen: v5e
topology: v5e:2x2
jax: 0.10.0
libtpu: 0.0.40
codegen_flags: <defaults>
</compile_context>

<pallas_src>
import functools

import jax
import jax.numpy as jnp
from jax import lax
from jax.experimental import pallas as pl
from jax.experimental.pallas import tpu as pltpu

NEG_SLOPE = 0.01   # F.leaky_relu default negative_slope
EPS = 1e-12        # F.normalize default eps
_MIB = 1024 * 1024


def _compiler_params(semantics, vmem_bytes_estimate):
    # Explicit scoped-VMEM budget.  Capped at 64 MiB so the plan also fits
    # v7x (64 MiB physical VMEM); v5e/v6e have 128 MiB if more is ever needed.
    limit = int(min(max(vmem_bytes_estimate, 32 * _MIB), 64 * _MIB))
    return pltpu.CompilerParams(dimension_semantics=semantics,
                                vmem_limit_bytes=limit)


# ----------------------------------------------------------------------------
# Kernel 1: SparseInputLinear (x @ W + b) fused with leaky_relu, tiled over N.
# ----------------------------------------------------------------------------
def _pca_kernel(x_ref, w_ref, b_ref, o_ref):
    y = jnp.dot(x_ref[...], w_ref[...], preferred_element_type=jnp.float32)
    y = y + b_ref[...]                         # (1, out_dim) broadcasts
    o_ref[...] = jnp.where(y >= 0.0, y, NEG_SLOPE * y)


def pca_leaky_relu(x, w, b, *, row_tile=512):
    n, in_dim = x.shape
    out_dim = w.shape[1]
    tile = min(row_tile, n)
    n_pad = pl.cdiv(n, tile) * tile
    xp = x.astype(jnp.float32)
    if n_pad != n:
        xp = jnp.pad(xp, ((0, n_pad - n), (0, 0)))

    vmem_est = 4 * (2 * tile * in_dim + in_dim * out_dim
                    + 2 * tile * out_dim + out_dim) + 2 * _MIB
    out = pl.pallas_call(
        _pca_kernel,
        out_shape=jax.ShapeDtypeStruct((n_pad, out_dim), jnp.float32),
        grid_spec=pltpu.PrefetchScalarGridSpec(
            num_scalar_prefetch=0,
            grid=(n_pad // tile,),
            in_specs=[
                pl.BlockSpec((tile, in_dim), lambda i: (i, 0)),
                pl.BlockSpec((in_dim, out_dim), lambda i: (0, 0)),   # resident
                pl.BlockSpec((1, out_dim), lambda i: (0, 0)),        # resident
            ],
            out_specs=pl.BlockSpec((tile, out_dim), lambda i: (i, 0)),
        ),
        compiler_params=_compiler_params(("parallel",), vmem_est),
    )(xp, w.astype(jnp.float32), b.astype(jnp.float32).reshape(1, out_dim))
    return out[:n]


# ----------------------------------------------------------------------------
# Kernel 2: per-capsule L2 normalization (F.normalize over each capsule's
# delta_d columns), tiled over node rows.  Lane-dense via the (d, K) capsule
# assignment matrix G (no dd-wide sub-lane slices).
# ----------------------------------------------------------------------------
def _norm_kernel(h_ref, g_ref, gt_ref, o_ref):
    v = h_ref[...]
    ss = jnp.dot(v * v, g_ref[...], preferred_element_type=jnp.float32)  # (rows, K)
    # max(||v||, eps) == sqrt(max(sumsq, eps^2)); rsqrt on the EUP path.
    inv = lax.rsqrt(jnp.maximum(ss, EPS * EPS))
    o_ref[...] = v * jnp.dot(inv, gt_ref[...], preferred_element_type=jnp.float32)


def norm_caps_rows(h, G, Gt, *, row_tile=512):
    n, d = h.shape
    k = G.shape[1]
    tile = min(row_tile, n)
    n_pad = pl.cdiv(n, tile) * tile
    hp = h if n_pad == n else jnp.pad(h, ((0, n_pad - n), (0, 0)))
    vmem_est = 4 * (4 * tile * d + 2 * d * k) + 2 * _MIB
    out = pl.pallas_call(
        _norm_kernel,
        out_shape=jax.ShapeDtypeStruct((n_pad, d), jnp.float32),
        grid_spec=pltpu.PrefetchScalarGridSpec(
            num_scalar_prefetch=0,
            grid=(n_pad // tile,),
            in_specs=[
                pl.BlockSpec((tile, d), lambda i: (i, 0)),
                pl.BlockSpec((d, k), lambda i: (0, 0)),   # resident
                pl.BlockSpec((k, d), lambda i: (0, 0)),   # resident
            ],
            out_specs=pl.BlockSpec((tile, d), lambda i: (i, 0)),
        ),
        compiler_params=_compiler_params(("parallel",), vmem_est),
    )(hp, G, Gt)
    return out[:n]


# ----------------------------------------------------------------------------
# Kernel 3: routing iterations of one NeibRoutLayer, fused with the trailing
# leaky_relu of disen_encoder.
#
# grid = (n_iter, n_edge_tiles), both "arbitrary" (state carries across both).
# Inputs: x_norm (resident), z = x_norm[src] (edge-tiled, precomputed in the
# wrapper), trg tiles, capsule matrices G / Gt.  The (n, d) accumulator lives
# directly in o_ref (constant block index -> VMEM resident, one HBM writeback).
# The only (n, d) scratch is u (the evolving routed embedding).
# ----------------------------------------------------------------------------
def _rout_kernel(xn_ref, z_ref, trg_ref, g_ref, gt_ref, o_ref, u_sc, *, tau):
    it = pl.program_id(0)
    et = pl.program_id(1)
    n_it = pl.num_programs(0)
    n_et = pl.num_programs(1)

    G = g_ref[...]     # (d, K) capsule assignment (0/1)
    Gt = gt_ref[...]   # (K, d)

    def norm_caps(v):
        ss = jnp.dot(v * v, G, preferred_element_type=jnp.float32)      # (rows, K)
        inv = lax.rsqrt(jnp.maximum(ss, EPS * EPS))
        return v * jnp.dot(inv, Gt, preferred_element_type=jnp.float32)

    # ---- once per layer: u_0 = x_norm --------------------------------------
    @pl.when((it == 0) & (et == 0))
    def _init():
        u_sc[...] = xn_ref[...]

    # ---- start of every routing iteration: accumulator = x_norm ------------
    # (this is the "u += x" term of the module, applied up front)
    @pl.when(et == 0)
    def _start_iter():
        o_ref[...] = xn_ref[...]

    # ---- per edge tile ------------------------------------------------------
    n = xn_ref.shape[0]
    tm = z_ref.shape[0]

    trg = trg_ref[...]                                   # (TM, 1) int32; -1 = pad
    node_ids = lax.broadcasted_iota(jnp.int32, (tm, n), 1)
    T = (node_ids == trg).astype(jnp.float32)            # (TM, N); pad rows all-zero

    z = z_ref[...]                                       # (TM, d) = x_norm[src]
    u = u_sc[...]                                        # (N, d)

    # u[trg] via the same one-hot that does the scatter (single one-hot build)
    ut = jnp.dot(T, u, preferred_element_type=jnp.float32)               # (TM, d)

    # routing logits per capsule, softmax over capsules
    logits = jnp.dot(z * ut, G, preferred_element_type=jnp.float32) * (1.0 / tau)
    lmax = jnp.max(logits, axis=1, keepdims=True)
    e = jnp.exp(logits - lmax)
    p = e * pl.reciprocal(jnp.sum(e, axis=1, keepdims=True), approx=True)  # (TM, K)

    scatter_src = z * jnp.dot(p, Gt, preferred_element_type=jnp.float32)   # (TM, d)

    # scatter_add over trg: contract the edge axis of T.  Padded edges
    # (trg == -1) have all-zero one-hot rows -> contribute nothing.
    contrib = lax.dot_general(
        T, scatter_src,
        dimension_numbers=(((0,), (0,)), ((), ())),
        preferred_element_type=jnp.float32)                                # (N, d)
    o_ref[...] = o_ref[...] + contrib

    # ---- end of a non-final routing iteration: u <- normalize(acc) ---------
    @pl.when((et == n_et - 1) & (it < n_it - 1))
    def _end_iter():
        u_sc[...] = norm_caps(o_ref[...])

    # ---- end of the FINAL iteration only: emit leaky_relu(normalize(acc)) --
    @pl.when((et == n_et - 1) & (it == n_it - 1))
    def _finalize():
        u_new = norm_caps(o_ref[...])
        o_ref[...] = jnp.where(u_new >= 0.0, u_new, NEG_SLOPE * u_new)


def rout_layer(h, src, trg, *, k, niter, tau=1.0, edge_tile=512):
    n, d = h.shape
    m = src.shape[0]
    tm = max(8, (int(edge_tile) + 7) // 8 * 8)
    m_pad = pl.cdiv(m, tm) * tm
    n_et = m_pad // tm

    # capsule assignment matrix (d, K): G[j, c] = 1 iff column j is in capsule c
    dd = d // k
    caps_of_col = jnp.arange(d, dtype=jnp.int32) // dd
    G = (caps_of_col[:, None] == jnp.arange(k, dtype=jnp.int32)[None, :]
         ).astype(jnp.float32)
    Gt = G.T

    # per-capsule L2 normalization of the layer input (Pallas, row-tiled)
    xn = norm_caps_rows(h.astype(jnp.float32), G, Gt)

    # z = x_norm[src] is routing-iteration invariant -> gather once per layer
    # with a plain XLA gather, stream it into the kernel as (tm, d) tiles.
    src_i = src.astype(jnp.int32)
    trg_i = trg.astype(jnp.int32)
    if m_pad != m:
        # src pad -> 0 (gathered rows are killed by the trg one-hot);
        # trg pad -> -1 (matches no node -> all-zero one-hot row).
        src_i = jnp.concatenate([src_i, jnp.zeros((m_pad - m,), jnp.int32)])
        trg_i = jnp.concatenate([trg_i, jnp.full((m_pad - m,), -1, jnp.int32)])
    z = jnp.take(xn, src_i, axis=0)               # (m_pad, d)
    trg2d = trg_i.reshape(m_pad, 1)

    vmem_est = 4 * (2 * n * d      # resident x_norm input (double-buffered)
                    + 2 * n * d    # output / accumulator
                    + n * d        # u scratch
                    + n * d        # contrib temporary
                    + tm * n       # one-hot temporary
                    + 6 * tm * d   # z tiles + ut / scatter_src temporaries
                    ) + 2 * _MIB

    kern = functools.partial(_rout_kernel, tau=float(tau))
    return pl.pallas_call(
        kern,
        out_shape=jax.ShapeDtypeStruct((n, d), jnp.float32),
        grid_spec=pltpu.PrefetchScalarGridSpec(
            num_scalar_prefetch=0,
            grid=(niter, n_et),
            in_specs=[
                pl.BlockSpec((n, d), lambda it, et: (0, 0)),    # x_norm (resident)
                pl.BlockSpec((tm, d), lambda it, et: (et, 0)),  # z tile
                pl.BlockSpec((tm, 1), lambda it, et: (et, 0)),  # trg tile
                pl.BlockSpec((d, k), lambda it, et: (0, 0)),    # G  (resident)
                pl.BlockSpec((k, d), lambda it, et: (0, 0)),    # Gt (resident)
            ],
            out_specs=pl.BlockSpec((n, d), lambda it, et: (0, 0)),
            scratch_shapes=[pltpu.VMEM((n, d), jnp.float32)],   # u
        ),
        compiler_params=_compiler_params(("arbitrary", "arbitrary"), vmem_est),
    )(xn, z, trg2d, G, Gt)


# ----------------------------------------------------------------------------
# Full disen_encoder forward (dropout p = 0.0 -> identity)
# ----------------------------------------------------------------------------
def disen_encoder_forward(x, src, trg, W, b, *, K, n_iter, n_layer, tau=1.0,
                          edge_tile=512, pca_row_tile=512):
    h = pca_leaky_relu(x, W, b, row_tile=pca_row_tile)      # dropout(p=0) == id
    for _ in range(n_layer):
        h = rout_layer(h, src, trg, k=K, niter=n_iter, tau=tau,
                       edge_tile=edge_tile)                 # dropout(p=0) == id
    return h


# ----------------------------------------------------------------------------
# Pure-JAX reference (mirrors the PyTorch semantics) for a correctness check
# ----------------------------------------------------------------------------
def reference_forward(x, src, trg, W, b, *, K, n_iter, n_layer, tau=1.0):
    def leaky(y):
        return jnp.where(y >= 0.0, y, NEG_SLOPE * y)

    def norm_caps(h):
        n, d = h.shape
        dd = d // K
        h3 = h.reshape(n, K, dd)
        nrm = jnp.maximum(jnp.sqrt(jnp.sum(h3 * h3, axis=2, keepdims=True)), EPS)
        return (h3 / nrm).reshape(n, d)

    n = x.shape[0]
    m = src.shape[0]
    h = leaky(x.astype(jnp.float32) @ W + b)
    for _ in range(n_layer):
        d = h.shape[1]
        dd = d // K
        xn = norm_caps(h)
        z = xn[src]
        u = xn
        for _ in range(n_iter):
            p = jnp.sum(z.reshape(m, K, dd) * u[trg].reshape(m, K, dd), axis=2)
            p = jax.nn.softmax(p / tau, axis=1)
            ssrc = (z.reshape(m, K, dd) * p[:, :, None]).reshape(m, d)
            u = jnp.zeros((n, d), jnp.float32).at[trg].add(ssrc) + xn
            u = norm_caps(u)
        h = leaky(u)
    return h


if __name__ == "__main__":
    # Small, module-consistent shapes; exercise multi-tile grid paths
    # (2 node tiles for pca, 2 edge tiles incl. padding for routing).
    N_NODES   = 64
    M_EDGES   = 200
    INPUT_DIM = 96
    HIDDEN    = 64     # must be divisible by K
    K_CAPS    = 4
    N_ITER    = 3
    N_LAYER   = 2
    TAU       = 1.0

    key = jax.random.PRNGKey(0)
    kx, ks, kt, kw, kb = jax.random.split(key, 5)

    x = jax.random.normal(kx, (N_NODES, INPUT_DIM), dtype=jnp.float32)
    src = jax.random.randint(ks, (M_EDGES,), 0, N_NODES, dtype=jnp.int32)
    trg = jax.random.randint(kt, (M_EDGES,), 0, N_NODES, dtype=jnp.int32)

    # SparseInputLinear init: uniform(-stdv, stdv), stdv = 1/sqrt(out_dim)
    stdv = 1.0 / jnp.sqrt(jnp.float32(HIDDEN))
    W = jax.random.uniform(kw, (INPUT_DIM, HIDDEN), jnp.float32, -stdv, stdv)
    b = jax.random.uniform(kb, (HIDDEN,), jnp.float32, -stdv, stdv)

    out = disen_encoder_forward(x, src, trg, W, b,
                                K=K_CAPS, n_iter=N_ITER, n_layer=N_LAYER,
                                tau=TAU, edge_tile=128, pca_row_tile=32)
    out = jax.block_until_ready(out)

    ref = reference_forward(x, src, trg, W, b,
                            K=K_CAPS, n_iter=N_ITER, n_layer=N_LAYER, tau=TAU)
    ref = jax.block_until_ready(ref)

    assert out.shape == (N_NODES, HIDDEN)
    # Tolerance covers the EUP approximate reciprocal (softmax denominator)
    # and lax.rsqrt (normalization); everything else is f32.
    max_err = float(jnp.max(jnp.abs(out - ref)))
    assert jnp.allclose(out, ref, atol=2e-3, rtol=2e-3), \
        f"mismatch: max abs err {max_err}"

    print("KERNEL_OK")
</pallas_src>

<mosaic_0001>
module attributes {stable_mosaic.version = 11 : i64} {
  func.func @_pca_kernel(%arg0: i32, %arg1: memref<32x96xf32, #tpu.memory_space<vmem>>, %arg2: memref<96x64xf32, #tpu.memory_space<vmem>>, %arg3: memref<1x64xf32, #tpu.memory_space<vmem>>, %arg4: memref<32x64xf32, #tpu.memory_space<vmem>>) attributes {dimension_semantics = [#tpu.dimension_semantics<parallel>], iteration_bounds = array<i64: 2>, scalar_prefetch = 0 : i64, scratch_operands = 0 : i64, tpu.core_type = #tpu.core_type<tc>, window_params = [{transform_indices = @transform_0, window_bounds = array<i64: 32, 96>}, {pipeline_mode = #tpu.pipeline_mode<synchronous>, transform_indices = @transform_1, window_bounds = array<i64: 96, 64>}, {pipeline_mode = #tpu.pipeline_mode<synchronous>, transform_indices = @transform_2, window_bounds = array<i64: 1, 64>}, {transform_indices = @transform_3, window_bounds = array<i64: 32, 64>}]} {
    %c0 = arith.constant 0 : index
    %c0_0 = arith.constant 0 : index
    %0 = vector.load %arg1[%c0, %c0_0] : memref<32x96xf32, #tpu.memory_space<vmem>>, vector<32x96xf32>
    %c0_1 = arith.constant 0 : index
    %c0_2 = arith.constant 0 : index
    %1 = vector.load %arg2[%c0_1, %c0_2] : memref<96x64xf32, #tpu.memory_space<vmem>>, vector<96x64xf32>
    %cst = arith.constant dense<0.000000e+00> : vector<32x64xf32>
    %2 = tpu.matmul %0, %1, %cst {dimension_numbers = #tpu.dot_dimension_numbers<[1], [0], [0], [1], [0, 0, 1, 1], [], []>} : vector<32x96xf32>, vector<96x64xf32>, vector<32x64xf32> -> vector<32x64xf32>
    %c0_3 = arith.constant 0 : index
    %c0_4 = arith.constant 0 : index
    %3 = vector.load %arg3[%c0_3, %c0_4] : memref<1x64xf32, #tpu.memory_space<vmem>>, vector<1x64xf32>
    %4 = vector.broadcast %3 : vector<1x64xf32> to vector<32x64xf32>
    %5 = arith.addf %2, %4 : vector<32x64xf32>
    %cst_5 = arith.constant 0.000000e+00 : f32
    %6 = vector.broadcast %cst_5 : f32 to vector<32x64xf32>
    %7 = arith.cmpf oge, %5, %6 : vector<32x64xf32>
    %cst_6 = arith.constant 0.00999999977 : f32
    %8 = vector.broadcast %cst_6 : f32 to vector<32x64xf32>
    %9 = arith.mulf %8, %5 : vector<32x64xf32>
    %10 = arith.select %7, %5, %9 : vector<32x64xi1>, vector<32x64xf32>
    %c0_7 = arith.constant 0 : index
    %c0_8 = arith.constant 0 : index
    %11 = vector.load %arg4[%c0_7, %c0_8] : memref<32x64xf32, #tpu.memory_space<vmem>>, vector<32x64xf32>
    tpu.vector_store %arg4[%c0_7, %c0_8], %10 {strides = array<i32>} : memref<32x64xf32, #tpu.memory_space<vmem>>, vector<32x64xf32>,
    return
  }
  func.func @transform_0(%arg0: i32) -> (i32, i32) {
    %c0_i32 = arith.constant 0 : i32
    %c0_i32_0 = arith.constant 0 : i32
    return %arg0, %c0_i32 : i32, i32
  }
  func.func @transform_1(%arg0: i32) -> (i32, i32) {
    %c0_i32 = arith.constant 0 : i32
    %c0_i32_0 = arith.constant 0 : i32
    %c0_i32_1 = arith.constant 0 : i32
    return %c0_i32, %c0_i32_0 : i32, i32
  }
  func.func @transform_2(%arg0: i32) -> (i32, i32) {
    %c0_i32 = arith.constant 0 : i32
    %c0_i32_0 = arith.constant 0 : i32
    %c0_i32_1 = arith.constant 0 : i32
    return %c0_i32, %c0_i32_0 : i32, i32
  }
  func.func @transform_3(%arg0: i32) -> (i32, i32) {
    %c0_i32 = arith.constant 0 : i32
    %c0_i32_0 = arith.constant 0 : i32
    return %arg0, %c0_i32 : i32, i32
  }
}

</mosaic_0001>

<llo_original>
// kernel: tpu_custom_call.1
$region0: #{tpu_custom_call.1}
  #allocation0 [shape = 'u32[]', space=smem, size = 0x4, offset = 0x4, fixed_abs, tag = 'smem constant byte address 0x4 - core index']
  #allocation1 [shape = 'u32[72,128]{1,0:T(1,128)}', space=vmem, size = 0x9000, scoped, tag = 'internal scratch']
  %s0 = inlined_call_operand.vmem [shape: f32[64,96], index: 0, kind: input, shape index: {}]
  %s1 = inlined_call_operand.vmem [shape: f32[96,64], index: 1, kind: input, shape index: {}]
  %s2 = inlined_call_operand.vmem [shape: f32[1,64], index: 2, kind: input, shape index: {}]
  %s3 = inlined_call_operand.hbm [shape: f32[64,64], index: 3, kind: output, shape index: {}]
  %s4 = sld [smem:[#allocation0]]
  $region45: #{tpu_custom_call.1} parent=0
    _
  %s6 = ssub.s32 1, %s4
  %s7 = scalar_select 0, %s6, %s4
  $region1: #{tpu_custom_call.1} parent=0
    #allocation2 [shape = 'u8[32768]{0}', space=vmem, size = 0x8000, scoped, tag = 'output window, operand 0']
    #allocation3 [shape = 's32[2]{0}', space=sflag, size = 0x8, scoped, tag = 'scoped memory for tpu_custom_call.1']
    %8 = vsyncpa [#allocation3], 0
    %s9 = scalar_lea.sflag [#allocation3], 1
    %10 = vsyncpa %s9, 0
    loop: start=0, step=1, limit=4
    $region2: #{tpu_custom_call.1} parent=1 // loop_pre_header
      _
    $region3: #{tpu_custom_call.1} parent=1 // loop_header
      %s12 = sphi 0, %s16
      %p13 = scmp.ge.s32.totalorder %s12, 4
      %s22 = sphi 0, %s24
      %s25 = sphi 0, %s22
      %s26 = sphi 0, %s25
      %s42 = sphi 0, %s26
      %s46 = sphi 0, %s46
      %s48 = sphi 0, %s46
      %s49 = sphi 0, %s48
      %s63 = sphi 0, %s49
      %s67 = sphi 0, %s67
      %s69 = sphi 0, %s67
      %s70 = sphi 0, %s69
      %s84 = sphi 0, %s70
      %s90 = sphi 0, %s92
      %s93 = sphi 0, %s90
      %s94 = sphi 0, %s93
      %s110 = sphi 0, %s94
    $region4: #{tpu_custom_call.1} parent=1 // loop_header_branch
      %15 = sbr.rel (%p13) target = $region8
    $region5: #{tpu_custom_call.1} parent=1 // loop_body
      %s17 = ssub.s32 %s12, 1
      %s18 = ssub.s32 %s12, 2
      %s19 = sadd.s32 %s12, 1
      %s20 = ssub.s32 %s12, %s19
      %p21 = scmp.eq.s32.totalorder %s20, 0
      %s23 = sadd.s32 %s22, 1
      %s24 = scalar_select %p21, %s22, %s23
      %p27 = pneg %p21
      %p28 = scmp.eq.s32.totalorder %s12, 1
      %p29 = por %p27, %p28
      %p30 = scmp.ne.s32.totalorder %s22, %s25
      %p31 = scmp.eq.s32.totalorder %s12, 0
      %p32 = por %p30, %p31
      %p33 = scmp.ne.s32.totalorder %s22, %s25
      %p34 = scmp.eq.s32.totalorder %s17, 1
      %p35 = por %p33, %p34
      %p36 = scmp.ne.s32.totalorder %s25, %s26
      %p37 = scmp.eq.s32.totalorder %s17, 0
      %p38 = por %p36, %p37
      %p39 = scmp.ne.s32.totalorder %s25, %s26
      %p40 = scmp.eq.s32.totalorder %s18, 1
      %p41 = por %p39, %p40
      %p43 = scmp.ne.s32.totalorder %s26, %s42
      %p44 = scmp.eq.s32.totalorder %s18, 0
      %p45 = por %p43, %p44
      %s47 = sadd.s32 %s46, 1
      %p50 = scmp.eq.s32.totalorder %s12, 1
      %p51 = scmp.ne.s32.totalorder %s46, %s48
      %p52 = scmp.eq.s32.totalorder %s12, 0
      %p53 = por %p51, %p52
      %p54 = scmp.ne.s32.totalorder %s46, %s48
      %p55 = scmp.eq.s32.totalorder %s17, 1
      %p56 = por %p54, %p55
      %p57 = scmp.ne.s32.totalorder %s48, %s49
      %p58 = scmp.eq.s32.totalorder %s17, 0
      %p59 = por %p57, %p58
      %p60 = scmp.ne.s32.totalorder %s48, %s49
      %p61 = scmp.eq.s32.totalorder %s18, 1
      %p62 = por %p60, %p61
      %p64 = scmp.ne.s32.totalorder %s49, %s63
      %p65 = scmp.eq.s32.totalorder %s18, 0
      %p66 = por %p64, %p65
      %s68 = sadd.s32 %s67, 1
      %p71 = scmp.eq.s32.totalorder %s12, 1
      %p72 = scmp.ne.s32.totalorder %s67, %s69
      %p73 = scmp.eq.s32.totalorder %s12, 0
      %p74 = por %p72, %p73
      %p75 = scmp.ne.s32.totalorder %s67, %s69
      %p76 = scmp.eq.s32.totalorder %s17, 1
      %p77 = por %p75, %p76
      %p78 = scmp.ne.s32.totalorder %s69, %s70
      %p79 = scmp.eq.s32.totalorder %s17, 0
      %p80 = por %p78, %p79
      %p81 = scmp.ne.s32.totalorder %s69, %s70
      %p82 = scmp.eq.s32.totalorder %s18, 1
      %p83 = por %p81, %p82
      %p85 = scmp.ne.s32.totalorder %s70, %s84
      %p86 = scmp.eq.s32.totalorder %s18, 0
      %p87 = por %p85, %p86
      %s88 = ssub.s32 %s12, %s19
      %p89 = scmp.eq.s32.totalorder %s88, 0
      %s91 = sadd.s32 %s90, 1
      %s92 = scalar_select %p89, %s90, %s91
      %p95 = pneg %p89
      %p96 = scmp.eq.s32.totalorder %s12, 1
      %p97 = por %p95, %p96
      %p98 = scmp.ne.s32.totalorder %s90, %s93
      %p99 = scmp.eq.s32.totalorder %s12, 0
      %p100 = por %p98, %p99
      %p101 = scmp.ne.s32.totalorder %s90, %s93
      %p102 = scmp.eq.s32.totalorder %s17, 1
      %p103 = por %p101, %p102
      %p104 = scmp.ne.s32.totalorder %s93, %s94
      %p105 = scmp.eq.s32.totalorder %s17, 0
      %p106 = por %p104, %p105
      %p107 = scmp.ne.s32.totalorder %s93, %s94
      %p108 = scmp.eq.s32.totalorder %s18, 1
      %p109 = por %p107, %p108
      %p111 = scmp.ne.s32.totalorder %s94, %s110
      %p112 = scmp.eq.s32.totalorder %s18, 0
      %p113 = por %p111, %p112
      %p114 = scmp.le.s32.totalorder 1, %s12
      %p115 = scmp.lt.s32.totalorder %s12, 3
      %p116 = pnand %p114, %p115
      %p117 = pneg %p116
      // Predicated region
      $region9: #{tpu_custom_call.1} parent=5 // pred_check
        _
      $region10: #{tpu_custom_call.1} parent=5 // pred_check_branch
        %119 = sbr.rel (%p116) target = $region12
      $region11: #{tpu_custom_call.1} parent=5 // pred_region
        %s120 = ssub.s32 %s12, 1
        // Predicated region
        $region13: #{tpu_custom_call.1} parent=11 // pred_check
          %p121 = pneg %p59
        $region14: #{tpu_custom_call.1} parent=11 // pred_check_branch
          %123 = sbr.rel (%p121) target = $region16
        $region15: #{tpu_custom_call.1} parent=11 // pred_region
          _
        $region16: #{tpu_custom_call.1} parent=11 // pred_fallthru
          _
        // Predicated region
        $region17: #{tpu_custom_call.1} parent=11 // pred_check
          %p124 = pneg %p80
        $region18: #{tpu_custom_call.1} parent=11 // pred_check_branch
          %126 = sbr.rel (%p124) target = $region20
        $region19: #{tpu_custom_call.1} parent=11 // pred_region
          _
        $region20: #{tpu_custom_call.1} parent=11 // pred_fallthru
          _
      $region12: #{tpu_custom_call.1} parent=5 // pred_fallthru
        _
      %p127 = scmp.lt.s32.totalorder %s12, 2
      // Predicated region
      $region21: #{tpu_custom_call.1} parent=5 // pred_check
        %p128 = pneg %p127
      $region22: #{tpu_custom_call.1} parent=5 // pred_check_branch
        %130 = sbr.rel (%p128) target = $region24
      $region23: #{tpu_custom_call.1} parent=5 // pred_region
        // Predicated region
        $region25: #{tpu_custom_call.1} parent=23 // pred_check
          %p131 = pneg %p32
        $region26: #{tpu_custom_call.1} parent=23 // pred_check_branch
          %133 = sbr.rel (%p131) target = $region28
        $region27: #{tpu_custom_call.1} parent=23 // pred_region
          %s134 = smul.u32 4, %s12
          %p135 = scmp.lt.s32.totalorder %s134, 7
          %s136 = scalar_select %p135, %s134, 7
          %s137 = smul.addr %s136, 8
          %s138 = scalar_lea.vmem %s0, %s137
          %s139 = smul.u32 4, %s12
        $region28: #{tpu_custom_call.1} parent=23 // pred_fallthru
          _
      $region24: #{tpu_custom_call.1} parent=5 // pred_fallthru
        _
      %p140 = scmp.le.s32.totalorder 1, %s12
      %p141 = scmp.lt.s32.totalorder %s12, 3
      %p142 = pnand %p140, %p141
      %p143 = pneg %p142
      // Predicated region
      $region29: #{tpu_custom_call.1} parent=5 // pred_check
        _
      $region30: #{tpu_custom_call.1} parent=5 // pred_check_branch
        %145 = sbr.rel (%p142) target = $region32
      $region31: #{tpu_custom_call.1} parent=5 // pred_region
        %s146 = ssub.s32 %s12, 1
        %s147 = smul.u32 4, %s17
        %p148 = scmp.lt.s32.totalorder %s147, 7
        %s149 = scalar_select %p148, %s147, 7
        %s150 = smul.addr %s149, 8
        %s151 = scalar_lea.vmem %s0, %s150
        %p152 = pneg %p38
        %p153 = pneg %p35
        %p154 = pneg %p59
        %p155 = pneg %p56
        %p156 = pneg %p80
        %p157 = pneg %p77
        %p158 = pneg %p106
        %p159 = pneg %p103
        %s160 = sand.u32 %s93, 1
        %s161 = scalar_lea.sflag [#allocation3], %s160
        %s162 = sand.u32 %s93, 1
        %s163 = smul.addr %s162, 32
        %s164 = scalar_lea.vmem [#allocation2], %s163
        %s165 = smul.u32 4, %s17
        %p166 = scmp.lt.s32.totalorder %s165, 7
        %s167 = scalar_select %p166, %s165, 7
        %s168 = smul.addr %s167, 8
        %s169 = scalar_lea.vmem %s0, %s168
        %s170 = smul.u32 4, %s17
        %s171 = smul.u32 4, %s17
        %v172 = vld [vmem:[%s169] sm:$0xff]
        %v173 = vld [vmem:[%s169 + $0x8] sm:$0xff]
        %v174 = vld [vmem:[%s169 + $0x10] sm:$0xff]
        %v175 = vld [vmem:[%s169 + $0x18] sm:$0xff]
        %v176 = vld [vmem:[%s1] sm:$0xff]
        %v177 = vld [vmem:[%s1 + $0x8] sm:$0xff]
        %v178 = vld [vmem:[%s1 + $0x10] sm:$0xff]
        %v179 = vld [vmem:[%s1 + $0x18] sm:$0xff]
        %v180 = vld [vmem:[%s1 + $0x20] sm:$0xff]
        %v181 = vld [vmem:[%s1 + $0x28] sm:$0xff]
        %v182 = vld [vmem:[%s1 + $0x30] sm:$0xff]
        %v183 = vld [vmem:[%s1 + $0x38] sm:$0xff]
        %v184 = vld [vmem:[%s1 + $0x40] sm:$0xff]
        %v185 = vld [vmem:[%s1 + $0x48] sm:$0xff]
        %v186 = vld [vmem:[%s1 + $0x50] sm:$0xff]
        %v187 = vld [vmem:[%s1 + $0x58] sm:$0xff]
        %v188 = vld [vmem:[%s2] sm:$0x1]
        %v190 = vperm.slane %v188, 0
        %vm192 = vcmask 785408
        %v194 = vsel %vm192, %v172, 0
        %v197 = vsel %vm192, %v173, 0
        %v200 = vsel %vm192, %v174, 0
        %v203 = vsel %vm192, %v175, 0
        %205 = vmatpush.msra.mxu0 0.0
        %206 = vmatpush.msra.mxu0 0.0
        %207 = vmatpush.msra.mxu0 0.0
        %208 = vmatpush.msra.mxu0 0.0
        %209 = vmatpush.msra.mxu0 %v187
        %210 = vmatpush.msra.mxu0 %v186
        %211 = vmatpush.msra.mxu0 %v185
        %212 = vmatpush.msra.mxu0 %v184
        %213 = vmatpush.msra.mxu0 %v183
        %214 = vmatpush.msra.mxu0 %v182
        %215 = vmatpush.msra.mxu0 %v181
        %216 = vmatpush.msra.mxu0 %v180
        %217 = vmatpush.msra.mxu0 %v179
        %218 = vmatpush.msra.mxu0 %v178
        %219 = vmatpush.msra.mxu0 %v177
        %220 = vmatpush.msra.mxu0 %v176
        %221 = vmatmul.f32.gmra.mxu0 %v194
        %v222 = vpop.f32.mrf.mxu0
        %v223 = vadd.f32 %v190, %v222
        %224 = vmatmul.f32.gmra.mxu0 %v197
        %v225 = vpop.f32.mrf.mxu0
        %v226 = vadd.f32 %v190, %v225
        %227 = vmatmul.f32.gmra.mxu0 %v200
        %v228 = vpop.f32.mrf.mxu0
        %v229 = vadd.f32 %v190, %v228
        %230 = vmatmul.f32.gmra.mxu0 %v203
        %v231 = vpop.f32.mrf.mxu0
        %v232 = vadd.f32 %v190, %v231
        %233 = vdwg.mxu0
        %vm234 = vcmp.ge.f32.partialorder %v223, 0.0
        %vm235 = vcmp.ge.f32.partialorder %v226, 0.0
        %vm236 = vcmp.ge.f32.partialorder %v229, 0.0
        %vm237 = vcmp.ge.f32.partialorder %v232, 0.0
        %v238 = vmul.f32 %v223, 0.01
        %v239 = vmul.f32 %v226, 0.01
        %v240 = vmul.f32 %v229, 0.01
        %v241 = vmul.f32 %v232, 0.01
        %v242 = vsel %vm234, %v223, %v238
        %v243 = vsel %vm235, %v226, %v239
        %v244 = vsel %vm236, %v229, %v240
        %v245 = vsel %vm237, %v232, %v241
        %vm246 = vcmask 523264
        %247 = vst.msk [vmem:[%s164] sm:$0xff] %vm246, %v242
        %248 = vst.msk [vmem:[%s164 + $0x8] sm:$0xff] %vm246, %v243
        %249 = vst.msk [vmem:[%s164 + $0x10] sm:$0xff] %vm246, %v244
        %250 = vst.msk [vmem:[%s164 + $0x18] sm:$0xff] %vm246, %v245
        %s251 = sand.u32 %s93, 1
        %s252 = scalar_lea.sflag [#allocation3], %s251
        %s253 = sand.u32 %s93, 1
        %s254 = smul.addr %s253, 32
        %s255 = scalar_lea.vmem [#allocation2], %s254
        // Predicated region
        $region33: #{tpu_custom_call.1} parent=31 // pred_check
          %p256 = pneg %p103
        $region34: #{tpu_custom_call.1} parent=31 // pred_check_branch
          %258 = sbr.rel (%p256) target = $region36
        $region35: #{tpu_custom_call.1} parent=31 // pred_region
          %s259 = smul.u32 4, %s17
          %261 = vsyncadd %s252, 0
          %s262 = smul.addr %s259, 8
          %s263 = scalar_lea.hbm %s3, %s262
          %s264 = sshll.u32 %s255, 4
          %s265 = int_to_ptr.vmem [resolvable:$true] %s264
          %s266 = sshll.u32 %s263, 4
          %s267 = int_to_ptr.hbm [resolvable:$true] %s266
          %272 = dma.vmem_to_hbm [thread:$0]  %s265, 512, %s267, %s252, 128, 128, 8
        $region36: #{tpu_custom_call.1} parent=31 // pred_fallthru
          _
      $region32: #{tpu_custom_call.1} parent=5 // pred_fallthru
        _
      %p273 = scmp.le.s32.totalorder 2, %s12
      // Predicated region
      $region37: #{tpu_custom_call.1} parent=5 // pred_check
        %p274 = pneg %p273
      $region38: #{tpu_custom_call.1} parent=5 // pred_check_branch
        %276 = sbr.rel (%p274) target = $region40
      $region39: #{tpu_custom_call.1} parent=5 // pred_region
        %s277 = ssub.s32 %s12, 2
        // Predicated region
        $region41: #{tpu_custom_call.1} parent=39 // pred_check
          %p278 = pneg %p109
        $region42: #{tpu_custom_call.1} parent=39 // pred_check_branch
          %280 = sbr.rel (%p278) target = $region44
        $region43: #{tpu_custom_call.1} parent=39 // pred_region
          %s281 = sand.u32 %s94, 1
          %s282 = scalar_lea.sflag [#allocation3], %s281
          %s283 = sand.u32 %s94, 1
          %s284 = smul.addr %s283, 32
          %s285 = scalar_lea.vmem [#allocation2], %s284
          %287 = dma.done %s282, 512
        $region44: #{tpu_custom_call.1} parent=39 // pred_fallthru
          _
      $region40: #{tpu_custom_call.1} parent=5 // pred_fallthru
        _
    $region6: #{tpu_custom_call.1} parent=1 // loop_footer
      %s16 = sadd.s32 1, %s12
    $region7: #{tpu_custom_call.1} parent=1 // loop_footer_branch
      %11 = sbr.rel target = $region3
    $region8: #{tpu_custom_call.1} parent=1 // loop_exit
      _
    %288 = vsyncpa [#allocation3], 1
    %s289 = scalar_lea.sflag [#allocation3], 1
    %290 = vsyncpa %s289, 1

</llo_original>
